<compile_context>
chip_gen: v7x
topology: tpu7x:2x2x1
jax: 0.10.0
libtpu: 0.0.40
codegen_flags: <defaults>
</compile_context>

<pallas_src>
import functools

import jax
import jax.numpy as jnp
from jax.experimental import pallas as pl
from jax.experimental.pallas import tpu as pltpu

LANE = 128  # TPU lane width; classifier output is padded to this.


def mlp_kernel(x_ref, w0_ref, w1_ref, wc_ref, o_ref):
    # Mask is already folded into w0 (parameter-time), so no elementwise mul.
    h = jnp.dot(x_ref[...], w0_ref[...], preferred_element_type=jnp.float32)
    h = jnp.maximum(h, 0.0)

    h = jnp.dot(h, w1_ref[...], preferred_element_type=jnp.float32)
    h = jnp.maximum(h, 0.0)

    # Classifier (no ReLU); wc is padded to 128 lanes -> lane-dense store.
    o_ref[...] = jnp.dot(h, wc_ref[...], preferred_element_type=jnp.float32)


def prepare_params(mask, w0, w1, wc):
    """One-time conversion from PyTorch layout ([out, in], bias=False).

    Returns [in, out] weights with the mask folded into w0 and the classifier
    zero-padded to LANE output columns.  Call once, reuse across forward calls.
    """
    mask = mask.astype(jnp.float32)
    w0_t = jnp.transpose(w0).astype(jnp.float32) * mask[:, None]
    w1_t = jnp.transpose(w1).astype(jnp.float32)
    wc_t = jnp.transpose(wc).astype(jnp.float32)
    out_units = wc_t.shape[1]
    pad = (-out_units) % LANE
    wc_t = jnp.pad(wc_t, ((0, 0), (0, pad)))
    return w0_t, w1_t, wc_t, out_units


def _round_up(n, m):
    return ((n + m - 1) // m) * m


@functools.partial(jax.jit, static_argnames=("out_units", "tile_b"))
def mlp_forward(x, w0_t, w1_t, wc_t_pad, *, out_units, tile_b=256):
    """x: [B, in] f32. Weights from prepare_params. Returns [B, out_units]."""
    x = x.astype(jnp.float32)
    B, in_units = x.shape
    h0 = w0_t.shape[1]
    h1 = w1_t.shape[1]
    out_pad = wc_t_pad.shape[1]

    # Batch tile: multiple of 8 (f32 sublane); cap at tile_b, pad B up to it.
    tb = min(tile_b, _round_up(B, 8))
    b_pad = _round_up(B, tb)
    if b_pad != B:
        x = jnp.pad(x, ((0, b_pad - B), (0, 0)))

    grid = (b_pad // tb,)

    out = pl.pallas_call(
        mlp_kernel,
        out_shape=jax.ShapeDtypeStruct((b_pad, out_pad), jnp.float32),
        grid_spec=pltpu.PrefetchScalarGridSpec(
            num_scalar_prefetch=0,
            grid=grid,
            in_specs=[
                # x: tiled over batch, double-buffered by the pipeline.
                pl.BlockSpec((tb, in_units), lambda i: (i, 0)),
                # Weights: full-array blocks, VMEM-resident across the grid.
                pl.BlockSpec((in_units, h0), lambda i: (0, 0)),
                pl.BlockSpec((h0, h1), lambda i: (0, 0)),
                pl.BlockSpec((h1, out_pad), lambda i: (0, 0)),
            ],
            out_specs=pl.BlockSpec((tb, out_pad), lambda i: (i, 0)),
        ),
        compiler_params=pltpu.CompilerParams(
            dimension_semantics=("parallel",),
        ),
    )(x, w0_t, w1_t, wc_t_pad)

    return out[:B, :out_units]


def reference_forward(x, mask, w0, w1, wc):
    x = x * mask[None, :]
    h = jnp.maximum(x @ w0.T, 0.0)
    h = jnp.maximum(h @ w1.T, 0.0)
    return h @ wc.T


if __name__ == "__main__":
    # Small shapes consistent with the module:
    # MLP(input_units=16, hidden_units=[32, 32], output_units=1, bias=False)
    batch = 8
    input_units = 16
    hidden_units = [32, 32]
    output_units = 1

    key = jax.random.PRNGKey(0)
    kx, k0, k1, kc = jax.random.split(key, 4)

    x = jax.random.normal(kx, (batch, input_units), dtype=jnp.float32)
    # mask defaults to ones(input_units) in the module
    mask = jnp.ones((input_units,), dtype=jnp.float32)

    # weight.data.uniform_(-1, 1); PyTorch Linear weight layout [out, in].
    w0 = jax.random.uniform(k0, (hidden_units[0], input_units),
                            minval=-1.0, maxval=1.0, dtype=jnp.float32)
    w1 = jax.random.uniform(k1, (hidden_units[1], hidden_units[0]),
                            minval=-1.0, maxval=1.0, dtype=jnp.float32)
    wc = jax.random.uniform(kc, (output_units, hidden_units[1]),
                            minval=-1.0, maxval=1.0, dtype=jnp.float32)

    # One-time parameter conversion (hoisted out of the per-call hot path).
    w0_t, w1_t, wc_t_pad, out_units = prepare_params(mask, w0, w1, wc)

    out = mlp_forward(x, w0_t, w1_t, wc_t_pad, out_units=out_units)
    jax.block_until_ready(out)

    ref = reference_forward(x, mask, w0, w1, wc)
    assert out.shape == (batch, output_units)
    assert jnp.allclose(out, ref, atol=1e-4, rtol=1e-4)

    # Sanity check that batch tiling/padding path also works for a bigger,
    # non-tile-aligned batch.
    xb = jax.random.normal(kx, (1000, input_units), dtype=jnp.float32)
    outb = mlp_forward(xb, w0_t, w1_t, wc_t_pad, out_units=out_units)
    jax.block_until_ready(outb)
    refb = reference_forward(xb, mask, w0, w1, wc)
    assert outb.shape == (1000, output_units)
    assert jnp.allclose(outb, refb, atol=1e-4, rtol=1e-4)

    print("KERNEL_OK")
</pallas_src>

<mosaic_0001>
module attributes {stable_mosaic.version = 11 : i64} {
  func.func @mlp_kernel(%arg0: i32, %arg1: memref<8x16xf32, #tpu.memory_space<vmem>>, %arg2: memref<16x32xf32, #tpu.memory_space<vmem>>, %arg3: memref<32x32xf32, #tpu.memory_space<vmem>>, %arg4: memref<32x128xf32, #tpu.memory_space<vmem>>, %arg5: memref<8x128xf32, #tpu.memory_space<vmem>>) attributes {dimension_semantics = [#tpu.dimension_semantics<parallel>], iteration_bounds = array<i64: 1>, scalar_prefetch = 0 : i64, scratch_operands = 0 : i64, tpu.core_type = #tpu.core_type<tc>, window_params = [{transform_indices = @transform_0, window_bounds = array<i64: 8, 16>}, {pipeline_mode = #tpu.pipeline_mode<synchronous>, transform_indices = @transform_1, window_bounds = array<i64: 16, 32>}, {pipeline_mode = #tpu.pipeline_mode<synchronous>, transform_indices = @transform_2, window_bounds = array<i64: 32, 32>}, {pipeline_mode = #tpu.pipeline_mode<synchronous>, transform_indices = @transform_3, window_bounds = array<i64: 32, 128>}, {transform_indices = @transform_4, window_bounds = array<i64: 8, 128>}]} {
    %c0 = arith.constant 0 : index
    %c0_0 = arith.constant 0 : index
    %0 = vector.load %arg1[%c0, %c0_0] : memref<8x16xf32, #tpu.memory_space<vmem>>, vector<8x16xf32>
    %c0_1 = arith.constant 0 : index
    %c0_2 = arith.constant 0 : index
    %1 = vector.load %arg2[%c0_1, %c0_2] : memref<16x32xf32, #tpu.memory_space<vmem>>, vector<16x32xf32>
    %cst = arith.constant dense<0.000000e+00> : vector<8x32xf32>
    %2 = tpu.matmul %0, %1, %cst {dimension_numbers = #tpu.dot_dimension_numbers<[1], [0], [0], [1], [0, 0, 1, 1], [], []>} : vector<8x16xf32>, vector<16x32xf32>, vector<8x32xf32> -> vector<8x32xf32>
    %cst_3 = arith.constant 0.000000e+00 : f32
    %3 = vector.broadcast %cst_3 : f32 to vector<8x32xf32>
    %4 = arith.maximumf %2, %3 : vector<8x32xf32>
    %c0_4 = arith.constant 0 : index
    %c0_5 = arith.constant 0 : index
    %5 = vector.load %arg3[%c0_4, %c0_5] : memref<32x32xf32, #tpu.memory_space<vmem>>, vector<32x32xf32>
    %cst_6 = arith.constant dense<0.000000e+00> : vector<8x32xf32>
    %6 = tpu.matmul %4, %5, %cst_6 {dimension_numbers = #tpu.dot_dimension_numbers<[1], [0], [0], [1], [0, 0, 1, 1], [], []>} : vector<8x32xf32>, vector<32x32xf32>, vector<8x32xf32> -> vector<8x32xf32>
    %cst_7 = arith.constant 0.000000e+00 : f32
    %7 = vector.broadcast %cst_7 : f32 to vector<8x32xf32>
    %8 = arith.maximumf %6, %7 : vector<8x32xf32>
    %c0_8 = arith.constant 0 : index
    %c0_9 = arith.constant 0 : index
    %9 = vector.load %arg4[%c0_8, %c0_9] : memref<32x128xf32, #tpu.memory_space<vmem>>, vector<32x128xf32>
    %cst_10 = arith.constant dense<0.000000e+00> : vector<8x128xf32>
    %10 = tpu.matmul %8, %9, %cst_10 {dimension_numbers = #tpu.dot_dimension_numbers<[1], [0], [0], [1], [0, 0, 1, 1], [], []>} : vector<8x32xf32>, vector<32x128xf32>, vector<8x128xf32> -> vector<8x128xf32>
    %c0_11 = arith.constant 0 : index
    %c0_12 = arith.constant 0 : index
    %11 = vector.load %arg5[%c0_11, %c0_12] : memref<8x128xf32, #tpu.memory_space<vmem>>, vector<8x128xf32>
    tpu.vector_store %arg5[%c0_11, %c0_12], %10 {strides = array<i32>} : memref<8x128xf32, #tpu.memory_space<vmem>>, vector<8x128xf32>,
    return
  }
  func.func @transform_0(%arg0: i32) -> (i32, i32) {
    %c0_i32 = arith.constant 0 : i32
    %c0_i32_0 = arith.constant 0 : i32
    return %arg0, %c0_i32 : i32, i32
  }
  func.func @transform_1(%arg0: i32) -> (i32, i32) {
    %c0_i32 = arith.constant 0 : i32
    %c0_i32_0 = arith.constant 0 : i32
    %c0_i32_1 = arith.constant 0 : i32
    return %c0_i32, %c0_i32_0 : i32, i32
  }
  func.func @transform_2(%arg0: i32) -> (i32, i32) {
    %c0_i32 = arith.constant 0 : i32
    %c0_i32_0 = arith.constant 0 : i32
    %c0_i32_1 = arith.constant 0 : i32
    return %c0_i32, %c0_i32_0 : i32, i32
  }
  func.func @transform_3(%arg0: i32) -> (i32, i32) {
    %c0_i32 = arith.constant 0 : i32
    %c0_i32_0 = arith.constant 0 : i32
    %c0_i32_1 = arith.constant 0 : i32
    return %c0_i32, %c0_i32_0 : i32, i32
  }
  func.func @transform_4(%arg0: i32) -> (i32, i32) {
    %c0_i32 = arith.constant 0 : i32
    %c0_i32_0 = arith.constant 0 : i32
    return %arg0, %c0_i32 : i32, i32
  }
}

</mosaic_0001>

<llo_original>
// kernel: mlp_forward.1
$region0: #{mlp_forward.1}
  #allocation0 [shape = 'u32[]', space=smem, size = 0x4, offset = 0x4, fixed_abs, tag = 'smem constant byte address 0x4 - core index']
  #allocation1 [shape = 'u32[144,128]{1,0:T(1,128)}', space=vmem, size = 0x12000, scoped, tag = 'internal scratch']
  %s0 = inlined_call_operand.hbm [shape: f32[8,16], index: 0, kind: input, shape index: {}]
  %s1 = inlined_call_operand.hbm [shape: f32[16,32], index: 1, kind: input, shape index: {}]
  %s2 = inlined_call_operand.hbm [shape: f32[32,32], index: 2, kind: input, shape index: {}]
  %s3 = inlined_call_operand.hbm [shape: f32[32,128], index: 3, kind: input, shape index: {}]
  %s4 = inlined_call_operand.vmem [shape: f32[8,128], index: 4, kind: output, shape index: {}]
  %s5 = sld [smem:[#allocation0]]
  $region42: #{mlp_forward.1} parent=0
    _
  %s7 = ssub.s32 1, %s5
  %s8 = scalar_select 0, %s7, %s5
  $region1: #{mlp_forward.1} parent=0
    #allocation2 [shape = 'u8[4096]{0}', space=vmem, size = 0x1000, scoped, tag = 'input window, operand 0, single buffered']
    #allocation3 [shape = 's32[1]{0}', space=sflag, size = 0x4, scoped, tag = 'scoped memory for mlp_forward.1']
    #allocation4 [shape = 'u8[8192]{0}', space=vmem, size = 0x2000, scoped, tag = 'input window, operand 1, single buffered']
    #allocation5 [shape = 's32[1]{0}', space=sflag, size = 0x4, scoped, tag = 'scoped memory for mlp_forward.1']
    #allocation6 [shape = 'u8[16384]{0}', space=vmem, size = 0x4000, scoped, tag = 'input window, operand 2, single buffered']
    #allocation7 [shape = 'u8[16384]{0}', space=vmem, size = 0x4000, scoped, tag = 'input window, operand 3, single buffered']
    #allocation8 [shape = 's32[1]{0}', space=sflag, size = 0x4, scoped, tag = 'scoped memory for mlp_forward.1']
    %9 = vsyncpa [#allocation3], 0
    %10 = vsyncpa [#allocation5], 0
    %11 = vsyncpa [#allocation8], 0
    // Predicated region
    $region2: #{mlp_forward.1} parent=1 // pred_check
      _
    $region3: #{mlp_forward.1} parent=1 // pred_check_branch
      %13 = sbr.rel (0) target = $region5
    $region4: #{mlp_forward.1} parent=1 // pred_region
      %s15 = ssub.s32 128, 128
      %16 = vsyncadd [#allocation3], %s15
      %s18 = sshll.u32 [#allocation2], 4
      %s19 = int_to_ptr.vmem [resolvable:$true] %s18
      %21 = dma.hbm_to_vmem [thread:$0]  %s0, 128, %s19, [#allocation3]
    $region5: #{mlp_forward.1} parent=1 // pred_fallthru
      _
    // Predicated region
    $region6: #{mlp_forward.1} parent=1 // pred_check
      _
    $region7: #{mlp_forward.1} parent=1 // pred_check_branch
      %23 = sbr.rel (0) target = $region9
    $region8: #{mlp_forward.1} parent=1 // pred_region
      %s25 = ssub.s32 256, 256
      %26 = vsyncadd [#allocation5], %s25
      %s27 = sshll.u32 [#allocation4], 4
      %s28 = int_to_ptr.vmem [resolvable:$true] %s27
      %33 = dma.hbm_to_vmem [thread:$0]  %s1, 256, %s28, [#allocation5], 128, 128, 8
    $region9: #{mlp_forward.1} parent=1 // pred_fallthru
      _
    // Predicated region
    $region10: #{mlp_forward.1} parent=1 // pred_check
      _
    $region11: #{mlp_forward.1} parent=1 // pred_check_branch
      %35 = sbr.rel (0) target = $region13
    $region12: #{mlp_forward.1} parent=1 // pred_region
      %s37 = ssub.s32 512, 512
      %38 = vsyncadd [#allocation5], %s37
      %s39 = sshll.u32 [#allocation6], 4
      %s40 = int_to_ptr.vmem [resolvable:$true] %s39
      %45 = dma.hbm_to_vmem [thread:$0]  %s2, 512, %s40, [#allocation5], 128, 128, 8
    $region13: #{mlp_forward.1} parent=1 // pred_fallthru
      _
    // Predicated region
    $region14: #{mlp_forward.1} parent=1 // pred_check
      _
    $region15: #{mlp_forward.1} parent=1 // pred_check_branch
      %47 = sbr.rel (0) target = $region17
    $region16: #{mlp_forward.1} parent=1 // pred_region
      %s49 = ssub.s32 512, 512
      %50 = vsyncadd [#allocation8], %s49
      %s51 = sshll.u32 [#allocation7], 4
      %s52 = int_to_ptr.vmem [resolvable:$true] %s51
      %57 = dma.hbm_to_vmem [thread:$0]  %s3, 512, %s52, [#allocation8], 128, 128, 8
    $region17: #{mlp_forward.1} parent=1 // pred_fallthru
      _
    // Predicated region
    $region18: #{mlp_forward.1} parent=1 // pred_check
      _
    $region19: #{mlp_forward.1} parent=1 // pred_check_branch
      %59 = sbr.rel (0) target = $region21
    $region20: #{mlp_forward.1} parent=1 // pred_region
      %60 = dma.done [#allocation3], 128
    $region21: #{mlp_forward.1} parent=1 // pred_fallthru
      _
    // Predicated region
    $region22: #{mlp_forward.1} parent=1 // pred_check
      _
    $region23: #{mlp_forward.1} parent=1 // pred_check_branch
      %62 = sbr.rel (0) target = $region25
    $region24: #{mlp_forward.1} parent=1 // pred_region
      %63 = dma.done [#allocation5], 256
    $region25: #{mlp_forward.1} parent=1 // pred_fallthru
      _
    // Predicated region
    $region26: #{mlp_forward.1} parent=1 // pred_check
      _
    $region27: #{mlp_forward.1} parent=1 // pred_check_branch
      %65 = sbr.rel (0) target = $region29
    $region28: #{mlp_forward.1} parent=1 // pred_region
      %66 = dma.done [#allocation5], 512
    $region29: #{mlp_forward.1} parent=1 // pred_fallthru
      _
    // Predicated region
    $region30: #{mlp_forward.1} parent=1 // pred_check
      _
    $region31: #{mlp_forward.1} parent=1 // pred_check_branch
      %68 = sbr.rel (0) target = $region33
    $region32: #{mlp_forward.1} parent=1 // pred_region
      %69 = dma.done [#allocation8], 512
    $region33: #{mlp_forward.1} parent=1 // pred_fallthru
      _
    %v70 = vld [vmem:[#allocation2] sm:$0xff]
    %v71 = vld [vmem:[#allocation4] sm:$0xff]
    %v72 = vld [vmem:[#allocation4 + $0x8] sm:$0xff]
    %vm73 = vcmask 130048
    %v75 = vsel %vm73, %v70, 0
    %77 = vmatprep.subr.mxu0 0.0
    %78 = vmatpush1.msra.mxu0 %v71
    %79 = vmatprep.subr.mxu0 0.0
    %80 = vmatpush1.msra.mxu0 %v72
    %81 = vmatprep.subr.mxu0 0.0
    %82 = vmatpush1.msra.mxu0 0.0
    %83 = vmatprep.subr.mxu0 0.0
    %84 = vmatpush1.msra.mxu0 0.0
    %85 = vmatprep.subr.mxu0 0.0
    %86 = vmatpush1.msra.mxu0 0.0
    %87 = vmatprep.subr.mxu0 0.0
    %88 = vmatpush1.msra.mxu0 0.0
    %89 = vmatprep.subr.mxu0 0.0
    %90 = vmatpush1.msra.mxu0 0.0
    %91 = vmatprep.subr.mxu0 0.0
    %92 = vmatpush1.msra.mxu0 0.0
    %93 = vmatprep.subr.mxu0 0.0
    %94 = vmatpush1.msra.mxu0 0.0
    %95 = vmatprep.subr.mxu0 0.0
    %96 = vmatpush1.msra.mxu0 0.0
    %97 = vmatprep.subr.mxu0 0.0
    %98 = vmatpush1.msra.mxu0 0.0
    %99 = vmatprep.subr.mxu0 0.0
    %100 = vmatpush1.msra.mxu0 0.0
    %101 = vmatprep.subr.mxu0 0.0
    %102 = vmatpush1.msra.mxu0 0.0
    %103 = vmatprep.subr.mxu0 0.0
    %104 = vmatpush1.msra.mxu0 0.0
    %105 = vmatprep.subr.mxu0 0.0
    %106 = vmatpush1.msra.mxu0 0.0
    %107 = vmatprep.subr.mxu0 0.0
    %108 = vmatpush1.msra.mxu0 0.0
    %109 = vmatprep.subr.mxu0 0.0
    %110 = vmatpush1.msra.mxu0 0.0
    %111 = vmatprep.subr.mxu0 0.0
    %112 = vmatpush1.msra.mxu0 0.0
    %113 = vmatprep.subr.mxu0 0.0
    %114 = vmatpush1.msra.mxu0 0.0
    %115 = vmatprep.subr.mxu0 0.0
    %116 = vmatpush1.msra.mxu0 0.0
    %117 = vmatprep.subr.mxu0 0.0
    %118 = vmatpush1.msra.mxu0 0.0
    %119 = vmatprep.subr.mxu0 0.0
    %120 = vmatpush1.msra.mxu0 0.0
    %121 = vmatprep.subr.mxu0 0.0
    %122 = vmatpush1.msra.mxu0 0.0
    %123 = vmatprep.subr.mxu0 0.0
    %124 = vmatpush1.msra.mxu0 0.0
    %125 = vmatprep.subr.mxu0 0.0
    %126 = vmatpush1.msra.mxu0 0.0
    %127 = vmatprep.subr.mxu0 0.0
    %128 = vmatpush1.msra.mxu0 0.0
    %129 = vmatprep.subr.mxu0 0.0
    %130 = vmatpush1.msra.mxu0 0.0
    %131 = vmatprep.subr.mxu0 0.0
    %132 = vmatpush1.msra.mxu0 0.0
    %133 = vmatprep.subr.mxu0 0.0
    %134 = vmatpush1.msra.mxu0 0.0
    %135 = vmatprep.subr.mxu0 0.0
    %136 = vmatpush1.msra.mxu0 0.0
    %137 = vmatprep.subr.mxu0 0.0
    %138 = vmatpush1.msra.mxu0 0.0
    %139 = vmatprep.subr.mxu0 0.0
    %140 = vmatpush1.msra.mxu0 0.0
    %141 = vmatprep.mubr.f32.mxu0 0.0
    %142 = vmatmul.mubr.f32.gmra.mrb[0].mxu0 %v75
    %v143 = vpop.f32.mrb[0].mxu0
    %v144 = vadd.f32 0.0, %v143
    %v145 = vpop.f32.mrb[0].mxu0
    %146 = vdwg.mxu0
    %v147 = vmax.f32 %v144, 0.0
    %v148 = vld [vmem:[#allocation6] sm:$0xff]
    %v149 = vld [vmem:[#allocation6 + $0x8] sm:$0xff]
    %v150 = vld [vmem:[#allocation6 + $0x10] sm:$0xff]
    %v151 = vld [vmem:[#allocation6 + $0x18] sm:$0xff]
    %vm152 = vcmask 261120
    %v154 = vsel %vm152, %v147, 0
    %156 = vmatprep.subr.mxu0 0.0
    %157 = vmatpush1.msra.mxu0 %v148
    %158 = vmatprep.subr.mxu0 0.0
    %159 = vmatpush1.msra.mxu0 %v149
    %160 = vmatprep.subr.mxu0 0.0
    %161 = vmatpush1.msra.mxu0 %v150
    %162 = vmatprep.subr.mxu0 0.0
    %163 = vmatpush1.msra.mxu0 %v151
    %164 = vmatprep.subr.mxu0 0.0
    %165 = vmatpush1.msra.mxu0 0.0
    %166 = vmatprep.subr.mxu0 0.0
    %167 = vmatpush1.msra.mxu0 0.0
    %168 = vmatprep.subr.mxu0 0.0
    %169 = vmatpush1.msra.mxu0 0.0
    %170 = vmatprep.subr.mxu0 0.0
    %171 = vmatpush1.msra.mxu0 0.0
    %172 = vmatprep.subr.mxu0 0.0
    %173 = vmatpush1.msra.mxu0 0.0
    %174 = vmatprep.subr.mxu0 0.0
    %175 = vmatpush1.msra.mxu0 0.0
    %176 = vmatprep.subr.mxu0 0.0
    %177 = vmatpush1.msra.mxu0 0.0
    %178 = vmatprep.subr.mxu0 0.0
    %179 = vmatpush1.msra.mxu0 0.0
    %180 = vmatprep.subr.mxu0 0.0
    %181 = vmatpush1.msra.mxu0 0.0
    %182 = vmatprep.subr.mxu0 0.0
    %183 = vmatpush1.msra.mxu0 0.0
    %184 = vmatprep.subr.mxu0 0.0
    %185 = vmatpush1.msra.mxu0 0.0
    %186 = vmatprep.subr.mxu0 0.0
    %187 = vmatpush1.msra.mxu0 0.0
    %188 = vmatprep.subr.mxu0 0.0
    %189 = vmatpush1.msra.mxu0 0.0
    %190 = vmatprep.subr.mxu0 0.0
    %191 = vmatpush1.msra.mxu0 0.0
    %192 = vmatprep.subr.mxu0 0.0
    %193 = vmatpush1.msra.mxu0 0.0
    %194 = vmatprep.subr.mxu0 0.0
    %195 = vmatpush1.msra.mxu0 0.0
    %196 = vmatprep.subr.mxu0 0.0
    %197 = vmatpush1.msra.mxu0 0.0
    %198 = vmatprep.subr.mxu0 0.0
    %199 = vmatpush1.msra.mxu0 0.0
    %200 = vmatprep.subr.mxu0 0.0
    %201 = vmatpush1.msra.mxu0 0.0
    %202 = vmatprep.subr.mxu0 0.0
    %203 = vmatpush1.msra.mxu0 0.0
    %204 = vmatprep.subr.mxu0 0.0
    %205 = vmatpush1.msra.mxu0 0.0
    %206 = vmatprep.subr.mxu0 0.0
    %207 = vmatpush1.msra.mxu0 0.0
    %208 = vmatprep.subr.mxu0 0.0
    %209 = vmatpush1.msra.mxu0 0.0
    %210 = vmatprep.subr.mxu0 0.0
    %211 = vmatpush1.msra.mxu0 0.0
    %212 = vmatprep.subr.mxu0 0.0
    %213 = vmatpush1.msra.mxu0 0.0
    %214 = vmatprep.subr.mxu0 0.0
    %215 = vmatpush1.msra.mxu0 0.0
    %216 = vmatprep.subr.mxu0 0.0
    %217 = vmatpush1.msra.mxu0 0.0
    %218 = vmatprep.subr.mxu0 0.0
    %219 = vmatpush1.msra.mxu0 0.0
    %220 = vmatprep.mubr.f32.mxu0 0.0
    %221 = vmatmul.mubr.f32.gmra.mrb[0].mxu0 %v154
    %v222 = vpop.f32.mrb[0].mxu0
    %v223 = vadd.f32 0.0, %v222
    %v224 = vpop.f32.mrb[0].mxu0
    %225 = vdwg.mxu0
    %v226 = vmax.f32 %v223, 0.0
    %v227 = vld [vmem:[#allocation7] sm:$0xff]
    %v228 = vld [vmem:[#allocation7 + $0x8] sm:$0xff]
    %v229 = vld [vmem:[#allocation7 + $0x10] sm:$0xff]
    %v230 = vld [vmem:[#allocation7 + $0x18] sm:$0xff]
    %v232 = vsel %vm152, %v226, 0
    %234 = vmatprep.subr.mxu0 0.0
    %235 = vmatpush1.msra.mxu0 %v227
    %236 = vmatprep.subr.mxu0 0.0
    %237 = vmatpush1.msra.mxu0 %v228
    %238 = vmatprep.subr.mxu0 0.0
    %239 = vmatpush1.msra.mxu0 %v229
    %240 = vmatprep.subr.mxu0 0.0
    %241 = vmatpush1.msra.mxu0 %v230
    %242 = vmatprep.subr.mxu0 0.0
    %243 = vmatpush1.msra.mxu0 0.0
    %244 = vmatprep.subr.mxu0 0.0
    %245 = vmatpush1.msra.mxu0 0.0
    %246 = vmatprep.subr.mxu0 0.0
    %247 = vmatpush1.msra.mxu0 0.0
    %248 = vmatprep.subr.mxu0 0.0
    %249 = vmatpush1.msra.mxu0 0.0
    %250 = vmatprep.subr.mxu0 0.0
    %251 = vmatpush1.msra.mxu0 0.0
    %252 = vmatprep.subr.mxu0 0.0
    %253 = vmatpush1.msra.mxu0 0.0
    %254 = vmatprep.subr.mxu0 0.0
    %255 = vmatpush1.msra.mxu0 0.0
    %256 = vmatprep.subr.mxu0 0.0
    %257 = vmatpush1.msra.mxu0 0.0
    %258 = vmatprep.subr.mxu0 0.0
    %259 = vmatpush1.msra.mxu0 0.0
    %260 = vmatprep.subr.mxu0 0.0
    %261 = vmatpush1.msra.mxu0 0.0
    %262 = vmatprep.subr.mxu0 0.0
    %263 = vmatpush1.msra.mxu0 0.0
    %264 = vmatprep.subr.mxu0 0.0
    %265 = vmatpush1.msra.mxu0 0.0
    %266 = vmatprep.subr.mxu0 0.0
    %267 = vmatpush1.msra.mxu0 0.0
    %268 = vmatprep.subr.mxu0 0.0
    %269 = vmatpush1.msra.mxu0 0.0
    %270 = vmatprep.subr.mxu0 0.0
    %271 = vmatpush1.msra.mxu0 0.0
    %272 = vmatprep.subr.mxu0 0.0
    %273 = vmatpush1.msra.mxu0 0.0
    %274 = vmatprep.subr.mxu0 0.0
    %275 = vmatpush1.msra.mxu0 0.0
    %276 = vmatprep.subr.mxu0 0.0
    %277 = vmatpush1.msra.mxu0 0.0
    %278 = vmatprep.subr.mxu0 0.0
    %279 = vmatpush1.msra.mxu0 0.0
    %280 = vmatprep.subr.mxu0 0.0
    %281 = vmatpush1.msra.mxu0 0.0
    %282 = vmatprep.subr.mxu0 0.0
    %283 = vmatpush1.msra.mxu0 0.0
    %284 = vmatprep.subr.mxu0 0.0
    %285 = vmatpush1.msra.mxu0 0.0
    %286 = vmatprep.subr.mxu0 0.0
    %287 = vmatpush1.msra.mxu0 0.0
    %288 = vmatprep.subr.mxu0 0.0
    %289 = vmatpush1.msra.mxu0 0.0
    %290 = vmatprep.subr.mxu0 0.0
    %291 = vmatpush1.msra.mxu0 0.0
    %292 = vmatprep.subr.mxu0 0.0
    %293 = vmatpush1.msra.mxu0 0.0
    %294 = vmatprep.subr.mxu0 0.0
    %295 = vmatpush1.msra.mxu0 0.0
    %296 = vmatprep.subr.mxu0 0.0
    %297 = vmatpush1.msra.mxu0 0.0
    %298 = vmatprep.mubr.f32.mxu0 0.0
    %299 = vmatmul.mubr.f32.gmra.mrb[0].mxu0 %v232
    %v300 = vpop.f32.mrb[0].mxu0
    %v301 = vadd.f32 0.0, %v300
    %v302 = vpop.f32.mrb[0].mxu0
    %303 = vdwg.mxu0
    %304 = vst [vmem:[%s4] sm:$0xff] %v301
    // Predicated region
    $region34: #{mlp_forward.1} parent=1 // pred_check
      _
    $region35: #{mlp_forward.1} parent=1 // pred_check_branch
      %306 = sbr.rel (0) target = $region37
    $region36: #{mlp_forward.1} parent=1 // pred_region
      _
    $region37: #{mlp_forward.1} parent=1 // pred_fallthru
      _
    // Predicated region
    $region38: #{mlp_forward.1} parent=1 // pred_check
      _
    $region39: #{mlp_forward.1} parent=1 // pred_check_branch
      %308 = sbr.rel (0) target = $region41
    $region40: #{mlp_forward.1} parent=1 // pred_region
      _
    $region41: #{mlp_forward.1} parent=1 // pred_fallthru
      _
    %309 = vsyncpa [#allocation3], 1
    %310 = vsyncpa [#allocation5], 1
    %311 = vsyncpa [#allocation8], 1

</llo_original>
